<compile_context>
chip_gen: v7x
topology: tpu7x:2x2x1
jax: 0.10.0
libtpu: 0.0.40
codegen_flags: <defaults>
</compile_context>

<pallas_src>
import functools
import math

import jax
import jax.numpy as jnp
from jax.experimental import pallas as pl
from jax.experimental.pallas import tpu as pltpu

EPS = 1e-5


def _ln_kernel_bias(x_ref, w_ref, b_ref, o_ref):
    # x_ref: (tm, H) tile of rows; w_ref/b_ref: (1, H) resident params.
    x = x_ref[...].astype(jnp.float32)
    inv_h = 1.0 / x.shape[-1]
    s = jnp.sum(x, axis=-1, keepdims=True)
    sq = jnp.sum(x * x, axis=-1, keepdims=True)
    mean = s * inv_h
    # Biased variance (divide by N), matching F.layer_norm. Guard tiny negative
    # values from the E[x^2] - mean^2 form.
    var = jnp.maximum(sq * inv_h - mean * mean, 0.0)
    inv = jax.lax.rsqrt(var + EPS)
    w = w_ref[...].astype(jnp.float32)
    b = b_ref[...].astype(jnp.float32)
    o_ref[...] = ((x - mean) * inv * w + b).astype(o_ref.dtype)


def _ln_kernel_nobias(x_ref, w_ref, o_ref):
    x = x_ref[...].astype(jnp.float32)
    inv_h = 1.0 / x.shape[-1]
    s = jnp.sum(x, axis=-1, keepdims=True)
    sq = jnp.sum(x * x, axis=-1, keepdims=True)
    mean = s * inv_h
    var = jnp.maximum(sq * inv_h - mean * mean, 0.0)
    inv = jax.lax.rsqrt(var + EPS)
    w = w_ref[...].astype(jnp.float32)
    o_ref[...] = ((x - mean) * inv * w).astype(o_ref.dtype)


def _vmem_capacity_bytes():
    """Per-core VMEM capacity; conservative fallback (v7x: 64 MiB) if unknown."""
    try:
        info = pltpu.get_tpu_info()
        cap = getattr(info, "vmem_capacity_bytes", None)
        if cap:
            return int(cap)
    except Exception:
        pass
    return 64 * 1024 * 1024


def _choose_block_rows(rows, H, itemsize, vmem_cap):
    """Largest row tile that fits the VMEM budget (double-buffered in/out +
    ~2 fp32 internal temps), rounded to a sublane-friendly multiple."""
    budget = (vmem_cap * 3) // 4  # leave headroom for compiler scratch
    per_row = H * (4 * itemsize + 2 * 4)  # 2x-buffered in+out + ~2 fp32 tiles
    tm = budget // max(per_row, 1)
    tm = max(min(tm, 1024), 8)
    if rows <= tm:
        return rows  # single block: full extent along rows (any row count ok)
    # Multiple of 16 keeps clean sublane packing for bf16/fp32 alike.
    tm = (tm // 16) * 16 if tm >= 16 else 8
    return max(tm, 8)


@functools.partial(jax.jit, static_argnames=("block_rows",))
def layer_norm(x, weight, bias=None, *, block_rows=None):
    """LayerNorm over the last dim of x (any leading shape), eps=1e-5.

    weight: (H,) scale; bias: optional (H,) shift (None == PyTorch bias=False).
    """
    orig_shape = x.shape
    H = orig_shape[-1]
    rows = int(math.prod(orig_shape[:-1])) if len(orig_shape) > 1 else 1
    x2 = x.reshape(rows, H)
    w2 = weight.reshape(1, H)

    vmem_cap = _vmem_capacity_bytes()
    itemsize = jnp.dtype(x.dtype).itemsize
    tm = block_rows if block_rows is not None else _choose_block_rows(
        rows, H, itemsize, vmem_cap)
    grid = (pl.cdiv(rows, tm),)

    row_spec = pl.BlockSpec((tm, H), lambda i: (i, 0))
    par_spec = pl.BlockSpec((1, H), lambda i: (0, 0))

    compiler_params = pltpu.CompilerParams(
        dimension_semantics=("parallel",),
        vmem_limit_bytes=int(vmem_cap * 0.9),
    )
    out_shape = jax.ShapeDtypeStruct((rows, H), x.dtype)

    if bias is None:
        out = pl.pallas_call(
            _ln_kernel_nobias,
            out_shape=out_shape,
            grid_spec=pltpu.PrefetchScalarGridSpec(
                num_scalar_prefetch=0,
                grid=grid,
                in_specs=[row_spec, par_spec],
                out_specs=row_spec,
            ),
            compiler_params=compiler_params,
        )(x2, w2)
    else:
        b2 = bias.reshape(1, H)
        out = pl.pallas_call(
            _ln_kernel_bias,
            out_shape=out_shape,
            grid_spec=pltpu.PrefetchScalarGridSpec(
                num_scalar_prefetch=0,
                grid=grid,
                in_specs=[row_spec, par_spec, par_spec],
                out_specs=row_spec,
            ),
            compiler_params=compiler_params,
        )(x2, w2, b2)

    return out.reshape(orig_shape)


if __name__ == "__main__":
    key = jax.random.PRNGKey(0)
    batch, seq, hidden = 2, 8, 32

    # Deterministic parameter init matching the module's __init__:
    # weight = ones(ndim), bias = zeros(ndim) (bias=True case).
    weight = jnp.ones((hidden,), dtype=jnp.float32)
    bias = jnp.zeros((hidden,), dtype=jnp.float32)

    x = jax.random.normal(key, (batch, seq, hidden), dtype=jnp.float32)

    # Reference (two-pass) in plain JAX.
    mean = jnp.mean(x, axis=-1, keepdims=True)
    var = jnp.mean((x - mean) ** 2, axis=-1, keepdims=True)
    ref = (x - mean) / jnp.sqrt(var + EPS) * weight + bias

    # bias=True path
    y = jax.block_until_ready(layer_norm(x, weight, bias))
    assert jnp.allclose(y, ref, atol=1e-5, rtol=1e-5), "mismatch vs reference (bias)"

    # bias=False path (module with bias=False)
    y_nb = jax.block_until_ready(layer_norm(x, weight, None))
    assert jnp.allclose(y_nb, ref, atol=1e-5, rtol=1e-5), "mismatch vs reference (no bias)"

    print("KERNEL_OK")
</pallas_src>

<mosaic_0001>
module attributes {stable_mosaic.version = 11 : i64} {
  func.func @_ln_kernel_bias(%arg0: i32, %arg1: memref<16x32xf32, #tpu.memory_space<vmem>>, %arg2: memref<1x32xf32, #tpu.memory_space<vmem>>, %arg3: memref<1x32xf32, #tpu.memory_space<vmem>>, %arg4: memref<16x32xf32, #tpu.memory_space<vmem>>) attributes {dimension_semantics = [#tpu.dimension_semantics<parallel>], iteration_bounds = array<i64: 1>, scalar_prefetch = 0 : i64, scratch_operands = 0 : i64, tpu.core_type = #tpu.core_type<tc>, window_params = [{transform_indices = @transform_0, window_bounds = array<i64: 16, 32>}, {pipeline_mode = #tpu.pipeline_mode<synchronous>, transform_indices = @transform_1, window_bounds = array<i64: 1, 32>}, {pipeline_mode = #tpu.pipeline_mode<synchronous>, transform_indices = @transform_2, window_bounds = array<i64: 1, 32>}, {transform_indices = @transform_3, window_bounds = array<i64: 16, 32>}]} {
    %c0 = arith.constant 0 : index
    %c0_0 = arith.constant 0 : index
    %0 = vector.load %arg1[%c0, %c0_0] : memref<16x32xf32, #tpu.memory_space<vmem>>, vector<16x32xf32>
    %cst = arith.constant dense<0.000000e+00> : vector<16xf32>
    %1 = vector.multi_reduction <add>, %0, %cst [1] : vector<16x32xf32> to vector<16xf32>
    %2 = vector.shape_cast %1 : vector<16xf32> to vector<16x1xf32>
    %3 = arith.mulf %0, %0 : vector<16x32xf32>
    %cst_1 = arith.constant dense<0.000000e+00> : vector<16xf32>
    %4 = vector.multi_reduction <add>, %3, %cst_1 [1] : vector<16x32xf32> to vector<16xf32>
    %5 = vector.shape_cast %4 : vector<16xf32> to vector<16x1xf32>
    %cst_2 = arith.constant 3.125000e-02 : f32
    %6 = vector.broadcast %cst_2 : f32 to vector<16x1xf32>
    %7 = arith.mulf %2, %6 : vector<16x1xf32>
    %cst_3 = arith.constant 3.125000e-02 : f32
    %8 = vector.broadcast %cst_3 : f32 to vector<16x1xf32>
    %9 = arith.mulf %5, %8 : vector<16x1xf32>
    %10 = arith.mulf %7, %7 : vector<16x1xf32>
    %11 = arith.subf %9, %10 : vector<16x1xf32>
    %cst_4 = arith.constant 0.000000e+00 : f32
    %12 = vector.broadcast %cst_4 : f32 to vector<16x1xf32>
    %13 = arith.maximumf %11, %12 : vector<16x1xf32>
    %cst_5 = arith.constant 9.99999974E-6 : f32
    %14 = vector.broadcast %cst_5 : f32 to vector<16x1xf32>
    %15 = arith.addf %13, %14 : vector<16x1xf32>
    %16 = math.rsqrt %15 : vector<16x1xf32>
    %c0_6 = arith.constant 0 : index
    %c0_7 = arith.constant 0 : index
    %17 = vector.load %arg2[%c0_6, %c0_7] : memref<1x32xf32, #tpu.memory_space<vmem>>, vector<1x32xf32>
    %c0_8 = arith.constant 0 : index
    %c0_9 = arith.constant 0 : index
    %18 = vector.load %arg3[%c0_8, %c0_9] : memref<1x32xf32, #tpu.memory_space<vmem>>, vector<1x32xf32>
    %19 = vector.broadcast %7 : vector<16x1xf32> to vector<16x32xf32>
    %20 = arith.subf %0, %19 : vector<16x32xf32>
    %21 = vector.broadcast %16 : vector<16x1xf32> to vector<16x32xf32>
    %22 = arith.mulf %20, %21 : vector<16x32xf32>
    %23 = vector.broadcast %17 : vector<1x32xf32> to vector<16x32xf32>
    %24 = arith.mulf %22, %23 : vector<16x32xf32>
    %25 = vector.broadcast %18 : vector<1x32xf32> to vector<16x32xf32>
    %26 = arith.addf %24, %25 : vector<16x32xf32>
    %c0_10 = arith.constant 0 : index
    %c0_11 = arith.constant 0 : index
    %27 = vector.load %arg4[%c0_10, %c0_11] : memref<16x32xf32, #tpu.memory_space<vmem>>, vector<16x32xf32>
    tpu.vector_store %arg4[%c0_10, %c0_11], %26 {strides = array<i32>} : memref<16x32xf32, #tpu.memory_space<vmem>>, vector<16x32xf32>,
    return
  }
  func.func @transform_0(%arg0: i32) -> (i32, i32) {
    %c0_i32 = arith.constant 0 : i32
    %c0_i32_0 = arith.constant 0 : i32
    return %arg0, %c0_i32 : i32, i32
  }
  func.func @transform_1(%arg0: i32) -> (i32, i32) {
    %c0_i32 = arith.constant 0 : i32
    %c0_i32_0 = arith.constant 0 : i32
    %c0_i32_1 = arith.constant 0 : i32
    return %c0_i32, %c0_i32_0 : i32, i32
  }
  func.func @transform_2(%arg0: i32) -> (i32, i32) {
    %c0_i32 = arith.constant 0 : i32
    %c0_i32_0 = arith.constant 0 : i32
    %c0_i32_1 = arith.constant 0 : i32
    return %c0_i32, %c0_i32_0 : i32, i32
  }
  func.func @transform_3(%arg0: i32) -> (i32, i32) {
    %c0_i32 = arith.constant 0 : i32
    %c0_i32_0 = arith.constant 0 : i32
    return %arg0, %c0_i32 : i32, i32
  }
}

</mosaic_0001>

<llo_original>
// kernel: layer_norm.1
$region0: #{layer_norm.1}
  #allocation0 [shape = 'u32[]', space=smem, size = 0x4, offset = 0x4, fixed_abs, tag = 'smem constant byte address 0x4 - core index']
  #allocation1 [shape = 'u32[144,128]{1,0:T(1,128)}', space=vmem, size = 0x12000, scoped, tag = 'internal scratch']
  %s0 = inlined_call_operand.hbm [shape: f32[16,32], index: 0, kind: input, shape index: {}]
  %s1 = inlined_call_operand.vmem [shape: f32[1,32], index: 1, kind: input, shape index: {}]
  %s2 = inlined_call_operand.vmem [shape: f32[1,32], index: 2, kind: input, shape index: {}]
  %s3 = inlined_call_operand.hbm [shape: f32[16,32], index: 3, kind: output, shape index: {}]
  %s4 = sld [smem:[#allocation0]]
  $region26: #{layer_norm.1} parent=0
    _
  %s6 = ssub.s32 1, %s4
  %s7 = scalar_select 0, %s6, %s4
  $region1: #{layer_norm.1} parent=0
    #allocation2 [shape = 'u8[8192]{0}', space=vmem, size = 0x2000, scoped, tag = 'input window, operand 0, single buffered']
    #allocation3 [shape = 's32[1]{0}', space=sflag, size = 0x4, scoped, tag = 'scoped memory for layer_norm.1']
    #allocation4 [shape = 's32[1]{0}', space=sflag, size = 0x4, scoped, tag = 'scoped memory for layer_norm.1']
    #allocation5 [shape = 'u8[8192]{0}', space=vmem, size = 0x2000, scoped, tag = 'output window, operand 0, single buffered']
    %8 = vsyncpa [#allocation3], 0
    %9 = vsyncpa [#allocation4], 0
    // Predicated region
    $region2: #{layer_norm.1} parent=1 // pred_check
      _
    $region3: #{layer_norm.1} parent=1 // pred_check_branch
      %11 = sbr.rel (0) target = $region5
    $region4: #{layer_norm.1} parent=1 // pred_region
      %s13 = ssub.s32 256, 256
      %14 = vsyncadd [#allocation3], %s13
      %s15 = sshll.u32 [#allocation2], 4
      %s16 = int_to_ptr.vmem [resolvable:$true] %s15
      %21 = dma.hbm_to_vmem [thread:$0]  %s0, 256, %s16, [#allocation3], 128, 128, 8
    $region5: #{layer_norm.1} parent=1 // pred_fallthru
      _
    // Predicated region
    $region6: #{layer_norm.1} parent=1 // pred_check
      _
    $region7: #{layer_norm.1} parent=1 // pred_check_branch
      %23 = sbr.rel (0) target = $region9
    $region8: #{layer_norm.1} parent=1 // pred_region
      _
    $region9: #{layer_norm.1} parent=1 // pred_fallthru
      _
    // Predicated region
    $region10: #{layer_norm.1} parent=1 // pred_check
      _
    $region11: #{layer_norm.1} parent=1 // pred_check_branch
      %25 = sbr.rel (0) target = $region13
    $region12: #{layer_norm.1} parent=1 // pred_region
      _
    $region13: #{layer_norm.1} parent=1 // pred_fallthru
      _
    // Predicated region
    $region14: #{layer_norm.1} parent=1 // pred_check
      _
    $region15: #{layer_norm.1} parent=1 // pred_check_branch
      %27 = sbr.rel (0) target = $region17
    $region16: #{layer_norm.1} parent=1 // pred_region
      %28 = dma.done [#allocation3], 256
    $region17: #{layer_norm.1} parent=1 // pred_fallthru
      _
    %v29 = vld [vmem:[#allocation2] sm:$0xff]
    %v30 = vld [vmem:[#allocation2 + $0x8] sm:$0xff]
    %vm31 = vcmask 261120
    %v32 = vsel %vm31, %v29, 0.0
    %33 = vadd.xlane.f32.xlu0 %v32
    %v34 = vpop.xlane.xlu0 %33
    %v35 = vsel %vm31, %v30, 0.0
    %36 = vadd.xlane.f32.xlu0 %v35
    %v37 = vpop.xlane.xlu0 %36
    %v38 = vmul.f32 %v29, %v29
    %v39 = vmul.f32 %v30, %v30
    %v40 = vsel %vm31, %v38, 0.0
    %41 = vadd.xlane.f32.xlu0 %v40
    %v42 = vpop.xlane.xlu0 %41
    %v43 = vsel %vm31, %v39, 0.0
    %44 = vadd.xlane.f32.xlu0 %v43
    %v45 = vpop.xlane.xlu0 %44
    %v46 = vmul.f32 %v34, 0.03125
    %v47 = vmul.f32 %v37, 0.03125
    %v48 = vmul.f32 %v42, 0.03125
    %v49 = vmul.f32 %v45, 0.03125
    %v50 = vmul.f32 %v46, %v46
    %v51 = vmul.f32 %v47, %v47
    %v52 = vsub.f32 %v48, %v50
    %v53 = vsub.f32 %v49, %v51
    %v54 = vmax.f32 %v52, 0.0
    %v55 = vmax.f32 %v53, 0.0
    %v56 = vadd.f32 %v54, 1e-05
    %v57 = vadd.f32 %v55, 1e-05
    %v58 = vrsqrt.pop %v56
    %v59 = vrsqrt.pop %v57
    %v60 = vld [vmem:[%s1] sm:$0x1]
    %v61 = vld [vmem:[%s2] sm:$0x1]
    %v62 = vsub.f32 %v29, %v46
    %v63 = vsub.f32 %v30, %v47
    %v64 = vmul.f32 %v62, %v58
    %v65 = vmul.f32 %v63, %v59
    %v67 = vlaneseq
    %v68 = vshrl.u32 %v67, 7
    %v69 = vsub.s32 0, %v68
    %v70 = vrot.slane %v60, %v69
    %v72 = vmul.f32 %v64, %v70
    %v73 = vmul.f32 %v65, %v70
    %v75 = vlaneseq
    %v76 = vshrl.u32 %v75, 7
    %v77 = vsub.s32 0, %v76
    %v78 = vrot.slane %v61, %v77
    %v80 = vadd.f32 %v72, %v78
    %v81 = vadd.f32 %v73, %v78
    %82 = vst.msk [vmem:[#allocation5] sm:$0xff] %vm31, %v80
    %83 = vst.msk [vmem:[#allocation5 + $0x8] sm:$0xff] %vm31, %v81
    // Predicated region
    $region18: #{layer_norm.1} parent=1 // pred_check
      _
    $region19: #{layer_norm.1} parent=1 // pred_check_branch
      %85 = sbr.rel (0) target = $region21
    $region20: #{layer_norm.1} parent=1 // pred_region
      %s87 = ssub.s32 256, 256
      %88 = vsyncadd [#allocation4], %s87
      %s89 = sshll.u32 [#allocation5], 4
      %s90 = int_to_ptr.vmem [resolvable:$true] %s89
      %95 = dma.vmem_to_hbm [thread:$0]  %s90, 256, %s3, [#allocation4], 128, 128, 8
    $region21: #{layer_norm.1} parent=1 // pred_fallthru
      _
    // Predicated region
    $region22: #{layer_norm.1} parent=1 // pred_check
      _
    $region23: #{layer_norm.1} parent=1 // pred_check_branch
      %97 = sbr.rel (0) target = $region25
    $region24: #{layer_norm.1} parent=1 // pred_region
      %98 = dma.done [#allocation4], 256
    $region25: #{layer_norm.1} parent=1 // pred_fallthru
      _
    %99 = vsyncpa [#allocation3], 1
    %100 = vsyncpa [#allocation4], 1

</llo_original>
